<compile_context>
chip_gen: v5e
topology: v5e:2x2
jax: 0.10.0
libtpu: 0.0.40
codegen_flags: <defaults>
</compile_context>

<pallas_src>
import jax
import jax.numpy as jnp
from jax.experimental import pallas as pl
from jax.experimental.pallas import tpu as pltpu

_LANE = 128
_SUBLANE = 8
# Per-core batch tile cap.  At K=O(100) and N=128 the double-buffered footprint
# of a 1024-row tile is well under 1 MiB, so this fits the scoped-VMEM default
# on v5e (16 MiB), v6e (32 MiB) and v7x (32 MiB) with no vmem_limit override.
# TODO(synk): re-derive this cap against v7x's 64 MiB physical VMEM if d_in
# grows large at production shapes (and bump to 2048-4096 rows there).
_MAX_BATCH_TILE = 1024


def _round_up(n, m):
    return ((n + m - 1) // m) * m


def _pick_batch_tile(b_pad):
    """Largest multiple of 8 that divides b_pad and is <= _MAX_BATCH_TILE."""
    m = b_pad // _SUBLANE
    limit = min(m, _MAX_BATCH_TILE // _SUBLANE)
    best = 1
    for t in range(1, limit + 1):
        if m % t == 0:
            best = t
    return _SUBLANE * best


def _fused_affine_kernel(x_ref, w_ref, b_ref, out_ref):
    # One MXU matmul per batch tile (bf16 operands, f32 accumulation) + a free
    # VPU bias add.  No K splitting: the op is HBM-bound, MXU slot has slack.
    acc = jnp.dot(x_ref[...], w_ref[...], preferred_element_type=jnp.float32)
    out_ref[...] = (acc + b_ref[...]).astype(out_ref.dtype)


def relation_prediction(datum, params, classes, domains):
    """datum: list of `streams` arrays, each (B, z, 1, 1).  Returns (class, domain) logits."""
    # --- glue: concat streams along channel dim, drop trailing singleton spatial dims ---
    x = jnp.concatenate(datum, axis=1)
    B = x.shape[0]
    x = x.reshape(B, -1)                                           # (B, z*streams), f32
    d_in = x.shape[1]

    (w1, b1, w2, b2, w3, b3, w1d, b1d, w2d, b2d, w3d, b3d) = params

    # --- fold each activation-free 3-layer head into one exact affine map (f32) ---
    w_eff_c = w1 @ w2 @ w3                                         # (d_in, classes)
    b_eff_c = (b1 @ w2 + b2) @ w3 + b3                             # (1, classes)
    w_eff_d = w1d @ w2d @ w3d                                      # (d_in, domains)
    b_eff_d = (b1d @ w2d + b2d) @ w3d + b3d                        # (1, domains)

    # --- fuse heads along the output dim; zero-pad to a lane-dense 128-wide slab ---
    total_out = classes + domains
    n_pad = _round_up(total_out, _LANE)
    w_fused = jnp.concatenate([w_eff_c, w_eff_d], axis=1)          # (d_in, total_out)
    b_fused = jnp.concatenate([b_eff_c, b_eff_d], axis=1)          # (1, total_out)
    w_fused = jnp.pad(w_fused, ((0, 0), (0, n_pad - total_out)))   # (d_in, n_pad)
    b_fused = jnp.pad(b_fused, ((0, 0), (0, n_pad - total_out)))   # (1, n_pad), f32

    # bf16 at the kernel boundary (fold stays f32); cast fuses with the concat.
    w_fused = w_fused.astype(jnp.bfloat16)
    x = x.astype(jnp.bfloat16)

    # --- batch grid: TB divides b_pad exactly, so no partial-block DMA past x ---
    b_pad = _round_up(B, _SUBLANE)
    tb = _pick_batch_tile(b_pad)
    if b_pad != B:
        # <= 7 rows of sublane padding; fuses with the concat/cast above.
        x = jnp.pad(x, ((0, b_pad - B), (0, 0)))
    grid = (b_pad // tb,)

    flops = 2 * b_pad * d_in * n_pad
    bytes_accessed = 2 * (b_pad * d_in + d_in * n_pad + b_pad * n_pad) + 4 * n_pad

    out = pl.pallas_call(
        _fused_affine_kernel,
        out_shape=jax.ShapeDtypeStruct((b_pad, n_pad), jnp.bfloat16),
        grid=grid,
        in_specs=[
            pl.BlockSpec((tb, d_in), lambda i: (i, 0)),       # batch-tiled activations
            pl.BlockSpec((d_in, n_pad), lambda i: (0, 0)),    # weights: VMEM-resident
            pl.BlockSpec((1, n_pad), lambda i: (0, 0)),       # fused bias (f32)
        ],
        out_specs=pl.BlockSpec((tb, n_pad), lambda i: (i, 0)),
        compiler_params=pltpu.CompilerParams(
            dimension_semantics=("parallel",),                # megacore batch sharding on v7x
        ),
        cost_estimate=pl.CostEstimate(
            flops=flops, transcendentals=0, bytes_accessed=bytes_accessed
        ),
    )(x, w_fused, b_fused)

    class_logits = out[:B, :classes].astype(jnp.float32)
    domain_logits = out[:B, classes:classes + domains].astype(jnp.float32)
    return class_logits, domain_logits


def init_params(key, z, streams, h, classes, domains):
    """Deterministic init.  Weights stored as (in_features, out_features); biases as (1, out)."""
    d_in = z * streams
    dims_class = [(d_in, h), (h, h), (h, classes)]
    dims_domain = [(d_in, h), (h, h), (h, domains)]
    params = []
    keys = jax.random.split(key, 12)
    ki = 0
    for fan_in, fan_out in dims_class + dims_domain:
        bound = 1.0 / jnp.sqrt(fan_in)  # torch.nn.Linear default init range
        w = jax.random.uniform(keys[ki], (fan_in, fan_out), jnp.float32, -bound, bound)
        ki += 1
        b = jax.random.uniform(keys[ki], (1, fan_out), jnp.float32, -bound, bound)
        ki += 1
        params += [w, b]
    return tuple(params)


if __name__ == "__main__":
    # Small shapes consistent with the module's forward.
    B, z, streams, h = 8, 8, 4, 32
    classes, domains = 16, 5

    key = jax.random.PRNGKey(0)
    k_params, k_data = jax.random.split(key)
    params = init_params(k_params, z, streams, h, classes, domains)

    data_keys = jax.random.split(k_data, streams)
    datum = [
        jax.random.normal(data_keys[s], (B, z, 1, 1), jnp.float32) for s in range(streams)
    ]

    class_logits, domain_logits = relation_prediction(datum, params, classes, domains)
    jax.block_until_ready((class_logits, domain_logits))

    # Pure-JAX f32 per-layer reference (Linear -> Linear -> Linear, no activations).
    x_ref = jnp.concatenate(datum, axis=1).reshape(B, z * streams)
    (w1, b1, w2, b2, w3, b3, w1d, b1d, w2d, b2d, w3d, b3d) = params
    ref_c = ((x_ref @ w1 + b1) @ w2 + b2) @ w3 + b3
    ref_d = ((x_ref @ w1d + b1d) @ w2d + b2d) @ w3d + b3d

    assert class_logits.shape == (B, classes) and domain_logits.shape == (B, domains)
    # Kernel runs with bf16 operands / bf16 output slab -> tolerance sized for bf16.
    assert jnp.allclose(class_logits, ref_c, rtol=2e-2, atol=2e-2), "class head mismatch"
    assert jnp.allclose(domain_logits, ref_d, rtol=2e-2, atol=2e-2), "domain head mismatch"

    print("KERNEL_OK")
</pallas_src>

<mosaic_0001>
module attributes {stable_mosaic.version = 11 : i64} {
  func.func @_fused_affine_kernel(%arg0: i32, %arg1: memref<8x32xbf16, #tpu.memory_space<vmem>>, %arg2: memref<32x128xbf16, #tpu.memory_space<vmem>>, %arg3: memref<1x128xf32, #tpu.memory_space<vmem>>, %arg4: memref<8x128xbf16, #tpu.memory_space<vmem>>) attributes {dimension_semantics = [#tpu.dimension_semantics<parallel>], iteration_bounds = array<i64: 1>, scalar_prefetch = 0 : i64, scratch_operands = 0 : i64, tpu.core_type = #tpu.core_type<tc>, window_params = [{transform_indices = @transform_0, window_bounds = array<i64: 8, 32>}, {pipeline_mode = #tpu.pipeline_mode<synchronous>, transform_indices = @transform_1, window_bounds = array<i64: 32, 128>}, {pipeline_mode = #tpu.pipeline_mode<synchronous>, transform_indices = @transform_2, window_bounds = array<i64: 1, 128>}, {transform_indices = @transform_3, window_bounds = array<i64: 8, 128>}]} {
    %c0 = arith.constant 0 : index
    %c0_0 = arith.constant 0 : index
    %0 = vector.load %arg1[%c0, %c0_0] : memref<8x32xbf16, #tpu.memory_space<vmem>>, vector<8x32xbf16>
    %c0_1 = arith.constant 0 : index
    %c0_2 = arith.constant 0 : index
    %1 = vector.load %arg2[%c0_1, %c0_2] : memref<32x128xbf16, #tpu.memory_space<vmem>>, vector<32x128xbf16>
    %cst = arith.constant dense<0.000000e+00> : vector<8x128xf32>
    %2 = tpu.matmul %0, %1, %cst {dimension_numbers = #tpu.dot_dimension_numbers<[1], [0], [0], [1], [0, 0, 1, 1], [], []>} : vector<8x32xbf16>, vector<32x128xbf16>, vector<8x128xf32> -> vector<8x128xf32>
    %c0_3 = arith.constant 0 : index
    %c0_4 = arith.constant 0 : index
    %3 = vector.load %arg3[%c0_3, %c0_4] : memref<1x128xf32, #tpu.memory_space<vmem>>, vector<1x128xf32>
    %4 = vector.broadcast %3 : vector<1x128xf32> to vector<8x128xf32>
    %5 = arith.addf %2, %4 : vector<8x128xf32>
    %6 = arith.truncf %5 : vector<8x128xf32> to vector<8x128xbf16>
    %c0_5 = arith.constant 0 : index
    %c0_6 = arith.constant 0 : index
    %7 = vector.load %arg4[%c0_5, %c0_6] : memref<8x128xbf16, #tpu.memory_space<vmem>>, vector<8x128xbf16>
    tpu.vector_store %arg4[%c0_5, %c0_6], %6 {strides = array<i32>} : memref<8x128xbf16, #tpu.memory_space<vmem>>, vector<8x128xbf16>,
    return
  }
  func.func @transform_0(%arg0: i32) -> (i32, i32) {
    %c0_i32 = arith.constant 0 : i32
    %c0_i32_0 = arith.constant 0 : i32
    return %arg0, %c0_i32 : i32, i32
  }
  func.func @transform_1(%arg0: i32) -> (i32, i32) {
    %c0_i32 = arith.constant 0 : i32
    %c0_i32_0 = arith.constant 0 : i32
    %c0_i32_1 = arith.constant 0 : i32
    return %c0_i32, %c0_i32_0 : i32, i32
  }
  func.func @transform_2(%arg0: i32) -> (i32, i32) {
    %c0_i32 = arith.constant 0 : i32
    %c0_i32_0 = arith.constant 0 : i32
    %c0_i32_1 = arith.constant 0 : i32
    return %c0_i32, %c0_i32_0 : i32, i32
  }
  func.func @transform_3(%arg0: i32) -> (i32, i32) {
    %c0_i32 = arith.constant 0 : i32
    %c0_i32_0 = arith.constant 0 : i32
    return %arg0, %c0_i32 : i32, i32
  }
}

</mosaic_0001>

<llo_original>
// kernel: tpu_custom_call.1
$region0: #{tpu_custom_call.1}
  #allocation0 [shape = 'u32[]', space=smem, size = 0x4, offset = 0x4, fixed_abs, tag = 'smem constant byte address 0x4 - core index']
  #allocation1 [shape = 'u32[72,128]{1,0:T(1,128)}', space=vmem, size = 0x9000, scoped, tag = 'internal scratch']
  %s0 = inlined_call_operand.hbm [shape: bf16[8,32], index: 0, kind: input, shape index: {}]
  %s1 = inlined_call_operand.hbm [shape: bf16[32,128], index: 1, kind: input, shape index: {}]
  %s2 = inlined_call_operand.vmem [shape: f32[1,128], index: 2, kind: input, shape index: {}]
  %s3 = inlined_call_operand.hbm [shape: bf16[8,128], index: 3, kind: output, shape index: {}]
  %s4 = sld [smem:[#allocation0]]
  $region30: #{tpu_custom_call.1} parent=0
    _
  %s6 = ssub.s32 1, %s4
  %s7 = scalar_select 0, %s6, %s4
  $region1: #{tpu_custom_call.1} parent=0
    #allocation2 [shape = 'u8[2048]{0}', space=vmem, size = 0x800, scoped, tag = 'input window, operand 0, single buffered']
    #allocation3 [shape = 's32[1]{0}', space=sflag, size = 0x4, scoped, tag = 'scoped memory for tpu_custom_call.1']
    #allocation4 [shape = 's32[1]{0}', space=sflag, size = 0x4, scoped, tag = 'scoped memory for tpu_custom_call.1']
    #allocation5 [shape = 'u8[8192]{0}', space=vmem, size = 0x2000, scoped, tag = 'input window, operand 1, single buffered']
    #allocation6 [shape = 's32[1]{0}', space=sflag, size = 0x4, scoped, tag = 'scoped memory for tpu_custom_call.1']
    #allocation7 [shape = 'u8[2048]{0}', space=vmem, size = 0x800, scoped, tag = 'output window, operand 0, single buffered']
    %8 = vsyncpa [#allocation3], 0
    %9 = vsyncpa [#allocation6], 0
    %10 = vsyncpa [#allocation4], 0
    // Predicated region
    $region2: #{tpu_custom_call.1} parent=1 // pred_check
      _
    $region3: #{tpu_custom_call.1} parent=1 // pred_check_branch
      %12 = sbr.rel (0) target = $region5
    $region4: #{tpu_custom_call.1} parent=1 // pred_region
      %14 = vsyncadd [#allocation3], 0
      %s16 = sshll.u32 %s0, 4
      %s17 = int_to_ptr.hbm [resolvable:$true] %s16
      %s18 = sshll.u32 [#allocation2], 4
      %s19 = int_to_ptr.vmem [resolvable:$true] %s18
      %21 = dma.hbm_to_vmem [thread:$0]  %s17, 64, %s19, [#allocation3]
    $region5: #{tpu_custom_call.1} parent=1 // pred_fallthru
      _
    // Predicated region
    $region6: #{tpu_custom_call.1} parent=1 // pred_check
      _
    $region7: #{tpu_custom_call.1} parent=1 // pred_check_branch
      %23 = sbr.rel (0) target = $region9
    $region8: #{tpu_custom_call.1} parent=1 // pred_region
      %25 = vsyncadd [#allocation6], 0
      %s26 = sshll.u32 %s1, 4
      %s27 = int_to_ptr.hbm [resolvable:$true] %s26
      %s28 = sshll.u32 [#allocation5], 4
      %s29 = int_to_ptr.vmem [resolvable:$true] %s28
      %34 = dma.hbm_to_vmem [thread:$0]  %s27, 256, %s29, [#allocation6], 64, 64, 4
    $region9: #{tpu_custom_call.1} parent=1 // pred_fallthru
      _
    // Predicated region
    $region10: #{tpu_custom_call.1} parent=1 // pred_check
      _
    $region11: #{tpu_custom_call.1} parent=1 // pred_check_branch
      %36 = sbr.rel (0) target = $region13
    $region12: #{tpu_custom_call.1} parent=1 // pred_region
      _
    $region13: #{tpu_custom_call.1} parent=1 // pred_fallthru
      _
    // Predicated region
    $region14: #{tpu_custom_call.1} parent=1 // pred_check
      _
    $region15: #{tpu_custom_call.1} parent=1 // pred_check_branch
      %38 = sbr.rel (0) target = $region17
    $region16: #{tpu_custom_call.1} parent=1 // pred_region
      %40 = dma.done [#allocation3], 64
    $region17: #{tpu_custom_call.1} parent=1 // pred_fallthru
      _
    // Predicated region
    $region18: #{tpu_custom_call.1} parent=1 // pred_check
      _
    $region19: #{tpu_custom_call.1} parent=1 // pred_check_branch
      %42 = sbr.rel (0) target = $region21
    $region20: #{tpu_custom_call.1} parent=1 // pred_region
      %44 = dma.done [#allocation6], 256
    $region21: #{tpu_custom_call.1} parent=1 // pred_fallthru
      _
    %v46 = vld [vmem:[#allocation2] sm:$0xf]
    %v47 = vld [vmem:[#allocation5] sm:$0xf]
    %v48 = vld [vmem:[#allocation5 + $0x4] sm:$0xf]
    %v49 = vld [vmem:[#allocation5 + $0x8] sm:$0xf]
    %v50 = vld [vmem:[#allocation5 + $0xc] sm:$0xf]
    %v51 = vld [vmem:[%s2] sm:$0x1]
    %v53 = vperm.slane %v51, 0
    %v59 = vunpack.c.l.b16 %v47
    %v60 = vunpack.c.l.b16 %v48
    %v61 = vunpack.c.l.b16 %v49
    %v62 = vunpack.c.l.b16 %v50
    %v63 = vpack.c.b16 %v60, %v59
    %v64 = vpack.c.b16 %v62, %v61
    %vm67 = vcmask 261120
    %v69 = vsel %vm67, %v46, 0
    %71 = vmatpush.bf16.msra.mxu0 0
    %72 = vmatpush.bf16.msra.mxu0 0
    %73 = vmatpush.bf16.msra.mxu0 0
    %74 = vmatpush.bf16.msra.mxu0 0
    %75 = vmatpush.bf16.msra.mxu0 0
    %76 = vmatpush.bf16.msra.mxu0 0
    %77 = vmatpush.bf16.msra.mxu0 %v64
    %78 = vmatpush.bf16.msra.mxu0 %v63
    %79 = vmatmul.bf16.gmra.mxu0 %v69
    %v80 = vpop.f32.mrf.mxu0
    %v81 = vadd.f32 %v53, %v80
    %v82 = vpop.f32.mrf.mxu0
    %83 = vdwg.mxu0
    %v84 = vpack.c.bf16 %v81, %v81
    %85 = vst [vmem:[#allocation7] sm:$0xf] %v84
    // Predicated region
    $region22: #{tpu_custom_call.1} parent=1 // pred_check
      _
    $region23: #{tpu_custom_call.1} parent=1 // pred_check_branch
      %87 = sbr.rel (0) target = $region25
    $region24: #{tpu_custom_call.1} parent=1 // pred_region
      %89 = vsyncadd [#allocation4], 0
      %s91 = sshll.u32 [#allocation7], 4
      %s92 = int_to_ptr.vmem [resolvable:$true] %s91
      %s93 = sshll.u32 %s3, 4
      %s94 = int_to_ptr.hbm [resolvable:$true] %s93
      %96 = dma.vmem_to_hbm [thread:$0]  %s92, 64, %s94, [#allocation4]
    $region25: #{tpu_custom_call.1} parent=1 // pred_fallthru
      _
    // Predicated region
    $region26: #{tpu_custom_call.1} parent=1 // pred_check
      _
    $region27: #{tpu_custom_call.1} parent=1 // pred_check_branch
      %98 = sbr.rel (0) target = $region29
    $region28: #{tpu_custom_call.1} parent=1 // pred_region
      %100 = dma.done [#allocation4], 64
    $region29: #{tpu_custom_call.1} parent=1 // pred_fallthru
      _
    %101 = vsyncpa [#allocation3], 1
    %102 = vsyncpa [#allocation6], 1
    %103 = vsyncpa [#allocation4], 1

</llo_original>
